<compile_context>
chip_gen: v7x
topology: tpu7x:2x2x1
jax: 0.10.0
libtpu: 0.0.40
codegen_flags: <defaults>
</compile_context>

<pallas_src>
import jax
import jax.numpy as jnp
from jax.experimental import pallas as pl
from jax.experimental.pallas import tpu as pltpu


def _discriminator_kernel(z_ref, w1_ref, w2_ref, b2_ref, w3_ref, b3_ref, out_ref):
    # z tile: (TILE_B, latent+1) f32; the last column is the ones column that
    # multiplies the folded-in b1 row. bf16 into the MXU, accumulate in f32.
    z = z_ref[...].astype(jnp.bfloat16)

    # Layer 1: Linear(latent, 512) with b1 folded into the augmented weight.
    h1 = jnp.dot(z, w1_ref[...], preferred_element_type=jnp.float32)
    h1 = jnp.maximum(h1, 0.2 * h1)                       # LeakyReLU(0.2)

    # Layer 2: Linear(512, 256) + bias + LeakyReLU(0.2).
    h2 = jnp.dot(h1.astype(jnp.bfloat16), w2_ref[...],
                 preferred_element_type=jnp.float32) + b2_ref[...]
    h2 = jnp.maximum(h2, 0.2 * h2)

    # Layer 3: Linear(256, 1). An N=1 MXU pass runs at <1% lane utilization, so do it
    # on the VPU (elementwise mul) + XLU (lane reduce). Pack the per-row scores into a
    # lane-dense (1, 1, TILE_B) row before the sigmoid/store so the EUP work and the
    # store / output DMA are wide and unmasked.
    s = jnp.sum(h2 * w3_ref[...], axis=-1)                # (TILE_B,), lane-major
    s = s[None, None, :] + b3_ref[...].reshape(1, 1, 1)   # (1, 1, TILE_B)
    out_ref[...] = jax.nn.sigmoid(s)                      # EUP


def _round_up(x, m):
    return (x + m - 1) // m * m


def _cdiv(a, b):
    return -(-a // b)


def _choose_tile_b(B, max_tile=1024):
    """Pick a batch-tile size.

    Small batches get one sublane-aligned tile. Larger batches get a tile that
    (a) minimizes batch padding, (b) keeps the grid at >= 2 (preferably even)
    steps so the two v7x TensorCores can each take tiles, and (c) is large
    enough to amortize the fixed per-grid-step pipeline overhead.
    """
    if B <= 256:
        return _round_up(B, 8)
    candidates = set()
    for n_steps in range(2, _cdiv(B, 128) + 1):          # padding-minimizing candidates
        t = _round_up(_cdiv(B, n_steps), 8)
        if 128 <= t <= max_tile:
            candidates.add(t)
    for t in (256, 384, 512, 640, 768, 896, 1024):       # MXU/lane-friendly sizes
        if t <= max_tile:
            candidates.add(t)
    best_t, best_key = None, None
    for t in sorted(candidates):
        steps = _cdiv(B, t)
        if steps < 2:
            continue                                      # keep both v7x TCs busy
        pad = steps * t - B
        key = (pad, steps % 2, steps)                     # min pad, even steps, few steps
        if best_key is None or key < best_key:
            best_t, best_key = t, key
    return best_t if best_t is not None else 256


def discriminator_forward(z, params, tile_b=None):
    """Run the discriminator forward pass as a Pallas kernel.

    z: (B, latent_size) float32
    params: dict with w1 (L,512), b1 (1,512), w2 (512,256), b2 (1,256),
            w3 (256,1), b3 (1,1)   (weights stored transposed vs. PyTorch: x @ W + b)
    returns: (B, 1) float32 validity in (0, 1)
    """
    B, latent = z.shape
    if tile_b is None:
        tile_b = _choose_tile_b(B)
    num_tiles = _cdiv(B, tile_b)
    Bp = num_tiles * tile_b

    # Pad the batch to a tile multiple and append the ones column that multiplies the
    # folded-in layer-1 bias row (padded rows are garbage and sliced off below).
    z_aug = jnp.pad(z, ((0, Bp - B), (0, 1)), constant_values=1.0)   # (Bp, latent+1)

    # bf16 weights for MXU peak (f32 accumulation inside the dots).
    w1 = jnp.concatenate([params["w1"], params["b1"]], axis=0).astype(jnp.bfloat16)  # (L+1, 512)
    w2 = params["w2"].astype(jnp.bfloat16)                       # (512, 256)
    b2 = params["b2"].astype(jnp.float32)                        # (1, 256)
    w3 = params["w3"].reshape(1, -1).astype(jnp.float32)         # (1, 256) row for the VPU
    b3 = params["b3"].reshape(1, 1).astype(jnp.float32)          # (1, 1)

    # Weights/biases: full-array block with constant index_map -> VMEM-resident across
    # all grid steps (no re-DMA). Only the z / out tiles stream.
    const = lambda a: pl.BlockSpec(a.shape, lambda i: (0,) * a.ndim)

    flops = 2 * Bp * ((latent + 1) * 512 + 512 * 256 + 256)
    bytes_accessed = (z_aug.size * 4 + w1.size * 2 + w2.size * 2
                      + (b2.size + w3.size + b3.size) * 4 + Bp * 4)

    out = pl.pallas_call(
        _discriminator_kernel,
        out_shape=jax.ShapeDtypeStruct((num_tiles, 1, tile_b), jnp.float32),
        grid=(num_tiles,),
        in_specs=[
            pl.BlockSpec((tile_b, latent + 1), lambda i: (i, 0)),   # streamed z tile
            const(w1), const(w2), const(b2), const(w3), const(b3),
        ],
        out_specs=pl.BlockSpec((1, 1, tile_b), lambda i: (i, 0, 0)),  # lane-dense out tile
        compiler_params=pltpu.CompilerParams(
            dimension_semantics=("parallel",)),
        cost_estimate=pl.CostEstimate(
            flops=flops, transcendentals=Bp, bytes_accessed=bytes_accessed),
    )(z_aug, w1, w2, b2, w3, b3)

    # (num_tiles, 1, tile_b) row-major == batch order; reshape back to (B, 1).
    return out.reshape(Bp, 1)[:B]


def init_params(key, latent_size=10):
    """Deterministic parameter init mimicking PyTorch's default nn.Linear init:
    U(-1/sqrt(fan_in), 1/sqrt(fan_in)) for both weights and biases."""
    dims = [(latent_size, 512), (512, 256), (256, 1)]
    params = {}
    keys = jax.random.split(key, 2 * len(dims))
    for i, (fan_in, fan_out) in enumerate(dims):
        bound = 1.0 / jnp.sqrt(jnp.float32(fan_in))
        w = jax.random.uniform(keys[2 * i], (fan_in, fan_out),
                               minval=-bound, maxval=bound, dtype=jnp.float32)
        b = jax.random.uniform(keys[2 * i + 1], (1, fan_out),
                               minval=-bound, maxval=bound, dtype=jnp.float32)
        params[f"w{i + 1}"] = w
        params[f"b{i + 1}"] = b
    return params


def _reference_forward(z, params):
    # Pure-JAX reference mirroring the kernel's bf16-weights / f32-accumulation math
    # (including the bf16-rounded, folded b1).
    w1 = params["w1"].astype(jnp.bfloat16)
    b1 = params["b1"].astype(jnp.bfloat16).astype(jnp.float32)
    w2 = params["w2"].astype(jnp.bfloat16)
    h = jnp.dot(z.astype(jnp.bfloat16), w1, preferred_element_type=jnp.float32) + b1
    h = jnp.where(h > 0, h, 0.2 * h)
    h = jnp.dot(h.astype(jnp.bfloat16), w2, preferred_element_type=jnp.float32) + params["b2"]
    h = jnp.where(h > 0, h, 0.2 * h)
    h = h @ params["w3"] + params["b3"]
    return jax.nn.sigmoid(h)


if __name__ == "__main__":
    latent_size = 10
    key = jax.random.PRNGKey(0)
    k_params, k_z = jax.random.split(key)
    params = init_params(k_params, latent_size=latent_size)

    # Exercise the single-tile, padded odd-batch multi-tile, and even multi-tile paths.
    for batch in (8, 300, 512):
        z = jax.random.normal(jax.random.fold_in(k_z, batch),
                              (batch, latent_size), dtype=jnp.float32)
        out = discriminator_forward(z, params)
        out = jax.block_until_ready(out)

        ref = _reference_forward(z, params)
        assert out.shape == (batch, 1), out.shape
        assert jnp.allclose(out, ref, atol=2e-3, rtol=2e-3), \
            f"mismatch vs reference at batch={batch}"

    print("KERNEL_OK")
</pallas_src>

<mosaic_0001>
module attributes {stable_mosaic.version = 11 : i64} {
  func.func @_discriminator_kernel(%arg0: i32, %arg1: memref<8x11xf32, #tpu.memory_space<vmem>>, %arg2: memref<11x512xbf16, #tpu.memory_space<vmem>>, %arg3: memref<512x256xbf16, #tpu.memory_space<vmem>>, %arg4: memref<1x256xf32, #tpu.memory_space<vmem>>, %arg5: memref<1x256xf32, #tpu.memory_space<vmem>>, %arg6: memref<1x1xf32, #tpu.memory_space<vmem>>, %arg7: memref<1x1x8xf32, #tpu.memory_space<vmem>>) attributes {dimension_semantics = [#tpu.dimension_semantics<parallel>], iteration_bounds = array<i64: 1>, scalar_prefetch = 0 : i64, scratch_operands = 0 : i64, tpu.core_type = #tpu.core_type<tc>, window_params = [{transform_indices = @transform_0, window_bounds = array<i64: 8, 11>}, {pipeline_mode = #tpu.pipeline_mode<synchronous>, transform_indices = @transform_1, window_bounds = array<i64: 11, 512>}, {pipeline_mode = #tpu.pipeline_mode<synchronous>, transform_indices = @transform_2, window_bounds = array<i64: 512, 256>}, {pipeline_mode = #tpu.pipeline_mode<synchronous>, transform_indices = @transform_3, window_bounds = array<i64: 1, 256>}, {pipeline_mode = #tpu.pipeline_mode<synchronous>, transform_indices = @transform_4, window_bounds = array<i64: 1, 256>}, {pipeline_mode = #tpu.pipeline_mode<synchronous>, transform_indices = @transform_5, window_bounds = array<i64: 1, 1>}, {transform_indices = @transform_6, window_bounds = array<i64: 1, 1, 8>}]} {
    %c0 = arith.constant 0 : index
    %c0_0 = arith.constant 0 : index
    %0 = vector.load %arg1[%c0, %c0_0] : memref<8x11xf32, #tpu.memory_space<vmem>>, vector<8x11xf32>
    %1 = arith.truncf %0 : vector<8x11xf32> to vector<8x11xbf16>
    %c0_1 = arith.constant 0 : index
    %c0_2 = arith.constant 0 : index
    %2 = vector.load %arg2[%c0_1, %c0_2] : memref<11x512xbf16, #tpu.memory_space<vmem>>, vector<11x512xbf16>
    %cst = arith.constant dense<0.000000e+00> : vector<8x512xf32>
    %3 = tpu.matmul %1, %2, %cst {dimension_numbers = #tpu.dot_dimension_numbers<[1], [0], [0], [1], [0, 0, 1, 1], [], []>} : vector<8x11xbf16>, vector<11x512xbf16>, vector<8x512xf32> -> vector<8x512xf32>
    %cst_3 = arith.constant 2.000000e-01 : f32
    %4 = vector.broadcast %cst_3 : f32 to vector<8x512xf32>
    %5 = arith.mulf %4, %3 : vector<8x512xf32>
    %6 = arith.maximumf %3, %5 : vector<8x512xf32>
    %7 = arith.truncf %6 : vector<8x512xf32> to vector<8x512xbf16>
    %c0_4 = arith.constant 0 : index
    %c0_5 = arith.constant 0 : index
    %8 = vector.load %arg3[%c0_4, %c0_5] : memref<512x256xbf16, #tpu.memory_space<vmem>>, vector<512x256xbf16>
    %cst_6 = arith.constant dense<0.000000e+00> : vector<8x256xf32>
    %9 = tpu.matmul %7, %8, %cst_6 {dimension_numbers = #tpu.dot_dimension_numbers<[1], [0], [0], [1], [0, 0, 1, 1], [], []>} : vector<8x512xbf16>, vector<512x256xbf16>, vector<8x256xf32> -> vector<8x256xf32>
    %c0_7 = arith.constant 0 : index
    %c0_8 = arith.constant 0 : index
    %10 = vector.load %arg4[%c0_7, %c0_8] : memref<1x256xf32, #tpu.memory_space<vmem>>, vector<1x256xf32>
    %11 = vector.broadcast %10 : vector<1x256xf32> to vector<8x256xf32>
    %12 = arith.addf %9, %11 : vector<8x256xf32>
    %cst_9 = arith.constant 2.000000e-01 : f32
    %13 = vector.broadcast %cst_9 : f32 to vector<8x256xf32>
    %14 = arith.mulf %13, %12 : vector<8x256xf32>
    %15 = arith.maximumf %12, %14 : vector<8x256xf32>
    %c0_10 = arith.constant 0 : index
    %c0_11 = arith.constant 0 : index
    %16 = vector.load %arg5[%c0_10, %c0_11] : memref<1x256xf32, #tpu.memory_space<vmem>>, vector<1x256xf32>
    %17 = vector.broadcast %16 : vector<1x256xf32> to vector<8x256xf32>
    %18 = arith.mulf %15, %17 : vector<8x256xf32>
    %cst_12 = arith.constant dense<0.000000e+00> : vector<8xf32>
    %19 = vector.multi_reduction <add>, %18, %cst_12 [1] : vector<8x256xf32> to vector<8xf32>
    %20 = vector.shape_cast %19 : vector<8xf32> to vector<1x1x8xf32>
    %c0_13 = arith.constant 0 : index
    %c0_14 = arith.constant 0 : index
    %21 = vector.load %arg6[%c0_13, %c0_14] : memref<1x1xf32, #tpu.memory_space<vmem>>, vector<1x1xf32>
    %22 = vector.shape_cast %21 : vector<1x1xf32> to vector<1x1x1xf32>
    %23 = vector.broadcast %22 : vector<1x1x1xf32> to vector<1x1x8xf32>
    %24 = arith.addf %20, %23 : vector<1x1x8xf32>
    %25 = arith.negf %24 : vector<1x1x8xf32>
    %26 = math.exp %25 : vector<1x1x8xf32>
    %cst_15 = arith.constant 1.000000e+00 : f32
    %27 = vector.broadcast %cst_15 : f32 to vector<1x1x8xf32>
    %28 = arith.addf %27, %26 : vector<1x1x8xf32>
    %29 = arith.divf %27, %28 : vector<1x1x8xf32>
    %c0_16 = arith.constant 0 : index
    %c0_17 = arith.constant 0 : index
    %c0_18 = arith.constant 0 : index
    %30 = vector.load %arg7[%c0_16, %c0_17, %c0_18] : memref<1x1x8xf32, #tpu.memory_space<vmem>>, vector<1x1x8xf32>
    tpu.vector_store %arg7[%c0_16, %c0_17, %c0_18], %29 {strides = array<i32>} : memref<1x1x8xf32, #tpu.memory_space<vmem>>, vector<1x1x8xf32>,
    return
  }
  func.func @transform_0(%arg0: i32) -> (i32, i32) {
    %c0_i32 = arith.constant 0 : i32
    %c0_i32_0 = arith.constant 0 : i32
    return %arg0, %c0_i32 : i32, i32
  }
  func.func @transform_1(%arg0: i32) -> (i32, i32) {
    %c0_i32 = arith.constant 0 : i32
    %c0_i32_0 = arith.constant 0 : i32
    %c0_i32_1 = arith.constant 0 : i32
    return %c0_i32, %c0_i32_0 : i32, i32
  }
  func.func @transform_2(%arg0: i32) -> (i32, i32) {
    %c0_i32 = arith.constant 0 : i32
    %c0_i32_0 = arith.constant 0 : i32
    %c0_i32_1 = arith.constant 0 : i32
    return %c0_i32, %c0_i32_0 : i32, i32
  }
  func.func @transform_3(%arg0: i32) -> (i32, i32) {
    %c0_i32 = arith.constant 0 : i32
    %c0_i32_0 = arith.constant 0 : i32
    %c0_i32_1 = arith.constant 0 : i32
    return %c0_i32, %c0_i32_0 : i32, i32
  }
  func.func @transform_4(%arg0: i32) -> (i32, i32) {
    %c0_i32 = arith.constant 0 : i32
    %c0_i32_0 = arith.constant 0 : i32
    %c0_i32_1 = arith.constant 0 : i32
    return %c0_i32, %c0_i32_0 : i32, i32
  }
  func.func @transform_5(%arg0: i32) -> (i32, i32) {
    %c0_i32 = arith.constant 0 : i32
    %c0_i32_0 = arith.constant 0 : i32
    %c0_i32_1 = arith.constant 0 : i32
    return %c0_i32, %c0_i32_0 : i32, i32
  }
  func.func @transform_6(%arg0: i32) -> (i32, i32, i32) {
    %c0_i32 = arith.constant 0 : i32
    %c0_i32_0 = arith.constant 0 : i32
    %c0_i32_1 = arith.constant 0 : i32
    return %arg0, %c0_i32, %c0_i32_0 : i32, i32, i32
  }
}

</mosaic_0001>

<llo_original>
// kernel: tpu_custom_call.1
$region0: #{tpu_custom_call.1}
  #allocation0 [shape = 'u32[]', space=smem, size = 0x4, offset = 0x4, fixed_abs, tag = 'smem constant byte address 0x4 - core index']
  #allocation1 [shape = 'u32[144,128]{1,0:T(1,128)}', space=vmem, size = 0x12000, scoped, tag = 'internal scratch']
  #allocation2 [shape = 'f32[1,1]{1,0:T(1,128)S(1)}', space=vmem, size = 0x200, scoped, tag = 'scoped memory for tpu_custom_call.1']
  %s0 = inlined_call_operand.hbm [shape: f32[8,11], index: 0, kind: input, shape index: {}]
  %s1 = inlined_call_operand.hbm [shape: bf16[11,512], index: 1, kind: input, shape index: {}]
  %s2 = inlined_call_operand.hbm [shape: bf16[512,256], index: 2, kind: input, shape index: {}]
  %s3 = inlined_call_operand.vmem [shape: f32[1,256], index: 3, kind: input, shape index: {}]
  %s4 = inlined_call_operand.vmem [shape: f32[1,256], index: 4, kind: input, shape index: {}]
  %s5 = inlined_call_operand.<no memory space> [shape: f32[1,1], index: 5, kind: input, shape index: {}]
  %s6 = inlined_call_operand.hbm [shape: f32[1,1,8], index: 6, kind: output, shape index: {}]
  %s7 = sld [smem:[#allocation0]]
  $region46: #{tpu_custom_call.1} parent=0
    _
  %s9 = ssub.s32 1, %s7
  %s10 = scalar_select 0, %s9, %s7
  %v11 = vstv %s5
  %12 = vst [vmem:[#allocation2] sm:$0x1] %v11
  $region1: #{tpu_custom_call.1} parent=0
    #allocation3 [shape = 'u8[4096]{0}', space=vmem, size = 0x1000, scoped, tag = 'input window, operand 0, single buffered']
    #allocation4 [shape = 's32[1]{0}', space=sflag, size = 0x4, scoped, tag = 'scoped memory for tpu_custom_call.1']
    #allocation5 [shape = 's32[1]{0}', space=sflag, size = 0x4, scoped, tag = 'scoped memory for tpu_custom_call.1']
    #allocation6 [shape = 'u8[16384]{0}', space=vmem, size = 0x4000, scoped, tag = 'input window, operand 1, single buffered']
    #allocation7 [shape = 's32[1]{0}', space=sflag, size = 0x4, scoped, tag = 'scoped memory for tpu_custom_call.1']
    #allocation8 [shape = 'u8[262144]{0}', space=vmem, size = 0x40000, scoped, tag = 'input window, operand 2, single buffered']
    #allocation9 [shape = 'u8[512]{0}', space=vmem, size = 0x400, scoped, tag = 'output window, operand 0, single buffered']
    %13 = vsyncpa [#allocation4], 0
    %14 = vsyncpa [#allocation7], 0
    %15 = vsyncpa [#allocation5], 0
    // Predicated region
    $region2: #{tpu_custom_call.1} parent=1 // pred_check
      _
    $region3: #{tpu_custom_call.1} parent=1 // pred_check_branch
      %17 = sbr.rel (0) target = $region5
    $region4: #{tpu_custom_call.1} parent=1 // pred_region
      %s19 = ssub.s32 128, 128
      %20 = vsyncadd [#allocation4], %s19
      %s22 = sshll.u32 [#allocation3], 4
      %s23 = int_to_ptr.vmem [resolvable:$true] %s22
      %25 = dma.hbm_to_vmem [thread:$0]  %s0, 128, %s23, [#allocation4]
    $region5: #{tpu_custom_call.1} parent=1 // pred_fallthru
      _
    // Predicated region
    $region6: #{tpu_custom_call.1} parent=1 // pred_check
      _
    $region7: #{tpu_custom_call.1} parent=1 // pred_check_branch
      %27 = sbr.rel (0) target = $region9
    $region8: #{tpu_custom_call.1} parent=1 // pred_region
      %s29 = ssub.s32 512, 512
      %30 = vsyncadd [#allocation7], %s29
      %s31 = sshll.u32 [#allocation6], 4
      %s32 = int_to_ptr.vmem [resolvable:$true] %s31
      %37 = dma.hbm_to_vmem [thread:$0]  %s1, 512, %s32, [#allocation7], 256, 256, 16
    $region9: #{tpu_custom_call.1} parent=1 // pred_fallthru
      _
    // Predicated region
    $region10: #{tpu_custom_call.1} parent=1 // pred_check
      _
    $region11: #{tpu_custom_call.1} parent=1 // pred_check_branch
      %39 = sbr.rel (0) target = $region13
    $region12: #{tpu_custom_call.1} parent=1 // pred_region
      %s41 = ssub.s32 8192, 8192
      %42 = vsyncadd [#allocation7], %s41
      %s43 = sshll.u32 [#allocation8], 4
      %s44 = int_to_ptr.vmem [resolvable:$true] %s43
      %49 = dma.hbm_to_vmem [thread:$0]  %s2, 8192, %s44, [#allocation7], 128, 128, 8
    $region13: #{tpu_custom_call.1} parent=1 // pred_fallthru
      _
    // Predicated region
    $region14: #{tpu_custom_call.1} parent=1 // pred_check
      _
    $region15: #{tpu_custom_call.1} parent=1 // pred_check_branch
      %51 = sbr.rel (0) target = $region17
    $region16: #{tpu_custom_call.1} parent=1 // pred_region
      _
    $region17: #{tpu_custom_call.1} parent=1 // pred_fallthru
      _
    // Predicated region
    $region18: #{tpu_custom_call.1} parent=1 // pred_check
      _
    $region19: #{tpu_custom_call.1} parent=1 // pred_check_branch
      %53 = sbr.rel (0) target = $region21
    $region20: #{tpu_custom_call.1} parent=1 // pred_region
      _
    $region21: #{tpu_custom_call.1} parent=1 // pred_fallthru
      _
    // Predicated region
    $region22: #{tpu_custom_call.1} parent=1 // pred_check
      _
    $region23: #{tpu_custom_call.1} parent=1 // pred_check_branch
      %55 = sbr.rel (0) target = $region25
    $region24: #{tpu_custom_call.1} parent=1 // pred_region
      _
    $region25: #{tpu_custom_call.1} parent=1 // pred_fallthru
      _
    // Predicated region
    $region26: #{tpu_custom_call.1} parent=1 // pred_check
      _
    $region27: #{tpu_custom_call.1} parent=1 // pred_check_branch
      %57 = sbr.rel (0) target = $region29
    $region28: #{tpu_custom_call.1} parent=1 // pred_region
      %58 = dma.done [#allocation4], 128
    $region29: #{tpu_custom_call.1} parent=1 // pred_fallthru
      _
    // Predicated region
    $region30: #{tpu_custom_call.1} parent=1 // pred_check
      _
    $region31: #{tpu_custom_call.1} parent=1 // pred_check_branch
      %60 = sbr.rel (0) target = $region33
    $region32: #{tpu_custom_call.1} parent=1 // pred_region
      %61 = dma.done [#allocation7], 512
    $region33: #{tpu_custom_call.1} parent=1 // pred_fallthru
      _
    // Predicated region
    $region34: #{tpu_custom_call.1} parent=1 // pred_check
      _
    $region35: #{tpu_custom_call.1} parent=1 // pred_check_branch
      %63 = sbr.rel (0) target = $region37
    $region36: #{tpu_custom_call.1} parent=1 // pred_region
      %64 = dma.done [#allocation7], 8192
    $region37: #{tpu_custom_call.1} parent=1 // pred_fallthru
      _
    %v66 = vld [vmem:[#allocation3] sm:$0xff]
    %v67 = vpack.c.bf16 %v66, %v66
    %v68 = vld [vmem:[#allocation6] sm:$0xff]
    %v69 = vld [vmem:[#allocation6 + $0x8] sm:$0xff]
    %v70 = vld [vmem:[#allocation6 + $0x10] sm:$0x33]
    %v71 = vld [vmem:[#allocation6 + $0x18] sm:$0x33]
    %v76 = vunpack.c.l.b16 %v68
    %v77 = vunpack.c.h.b16 %v68
    %v78 = vunpack.c.l.b16 %v69
    %v79 = vunpack.c.h.b16 %v69
    %v80 = vunpack.c.l.b16 %v70
    %v81 = vunpack.c.h.b16 %v70
    %v82 = vunpack.c.l.b16 %v71
    %v83 = vunpack.c.h.b16 %v71
    %v84 = vpack.c.b16 %v80, %v76
    %v85 = vpack.c.b16 %v81, %v77
    %v86 = vpack.c.b16 %v82, %v78
    %v87 = vpack.c.b16 %v83, %v79
    %vm88 = vcmask 89088
    %v90 = vsel %vm88, %v67, 0
    %vm92 = vcmask 1044480
    %vm93 = vcmask 1045504
    %v94 = vsel %vm92, 4294967295, 65535
    %v95 = vsel %vm93, %v94, 0
    %v97 = vand.u32 %v84, %v95
    %v100 = vand.u32 %v85, %v95
    %v103 = vand.u32 %v86, %v95
    %v106 = vand.u32 %v87, %v95
    %108 = vmatprep.subr.bf16.mxu0 %v100
    %109 = vmatpush1.bf16.msra.mxu0 %v97
    %110 = vmatprep.subr.bf16.mxu0 0
    %111 = vmatpush1.bf16.msra.mxu0 0
    %112 = vmatprep.subr.bf16.mxu0 0
    %113 = vmatpush1.bf16.msra.mxu0 0
    %114 = vmatprep.subr.bf16.mxu0 0
    %115 = vmatpush1.bf16.msra.mxu0 0
    %116 = vmatprep.subr.bf16.mxu0 0
    %117 = vmatpush1.bf16.msra.mxu0 0
    %118 = vmatprep.subr.bf16.mxu0 0
    %119 = vmatpush1.bf16.msra.mxu0 0
    %120 = vmatprep.subr.bf16.mxu0 0
    %121 = vmatpush1.bf16.msra.mxu0 0
    %122 = vmatprep.subr.bf16.mxu0 0
    %123 = vmatpush1.bf16.msra.mxu0 0
    %124 = vmatprep.subr.bf16.mxu0 0
    %125 = vmatpush1.bf16.msra.mxu0 0
    %126 = vmatprep.subr.bf16.mxu0 0
    %127 = vmatpush1.bf16.msra.mxu0 0
    %128 = vmatprep.subr.bf16.mxu0 0
    %129 = vmatpush1.bf16.msra.mxu0 0
    %130 = vmatprep.subr.bf16.mxu0 0
    %131 = vmatpush1.bf16.msra.mxu0 0
    %132 = vmatprep.subr.bf16.mxu0 0
    %133 = vmatpush1.bf16.msra.mxu0 0
    %134 = vmatprep.subr.bf16.mxu0 0
    %135 = vmatpush1.bf16.msra.mxu0 0
    %136 = vmatprep.subr.bf16.mxu0 0
    %137 = vmatpush1.bf16.msra.mxu0 0
    %138 = vmatprep.subr.bf16.mxu0 0
    %139 = vmatpush1.bf16.msra.mxu0 0
    %140 = vmatprep.mubr.bf16.mxu0 0
    %141 = vmatmul.mubr.bf16.gmra.mrb[0].mxu0 %v90
    %v142 = vpop.f32.mrb[0].mxu0
    %v143 = vadd.f32 0.0, %v142
    %v144 = vpop.f32.mrb[0].mxu0
    %v145 = vadd.f32 0.0, %v144
    %v146 = vpop.f32.mrb[0].mxu0
    %v147 = vpop.f32.mrb[0].mxu0
    %148 = vdwg.mxu0
    %149 = vmatprep.subr.bf16.mxu0 %v106
    %150 = vmatpush1.bf16.msra.mxu0 %v103
    %151 = vmatprep.subr.bf16.mxu0 0
    %152 = vmatpush1.bf16.msra.mxu0 0
    %153 = vmatprep.subr.bf16.mxu0 0
    %154 = vmatpush1.bf16.msra.mxu0 0
    %155 = vmatprep.subr.bf16.mxu0 0
    %156 = vmatpush1.bf16.msra.mxu0 0
    %157 = vmatprep.subr.bf16.mxu0 0
    %158 = vmatpush1.bf16.msra.mxu0 0
    %159 = vmatprep.subr.bf16.mxu0 0
    %160 = vmatpush1.bf16.msra.mxu0 0
    %161 = vmatprep.subr.bf16.mxu0 0
    %162 = vmatpush1.bf16.msra.mxu0 0
    %163 = vmatprep.subr.bf16.mxu0 0
    %164 = vmatpush1.bf16.msra.mxu0 0
    %165 = vmatprep.subr.bf16.mxu0 0
    %166 = vmatpush1.bf16.msra.mxu0 0
    %167 = vmatprep.subr.bf16.mxu0 0
    %168 = vmatpush1.bf16.msra.mxu0 0
    %169 = vmatprep.subr.bf16.mxu0 0
    %170 = vmatpush1.bf16.msra.mxu0 0
    %171 = vmatprep.subr.bf16.mxu0 0
    %172 = vmatpush1.bf16.msra.mxu0 0
    %173 = vmatprep.subr.bf16.mxu0 0
    %174 = vmatpush1.bf16.msra.mxu0 0
    %175 = vmatprep.subr.bf16.mxu0 0
    %176 = vmatpush1.bf16.msra.mxu0 0
    %177 = vmatprep.subr.bf16.mxu0 0
    %178 = vmatpush1.bf16.msra.mxu0 0
    %179 = vmatprep.subr.bf16.mxu0 0
    %180 = vmatpush1.bf16.msra.mxu0 0
    %181 = vmatprep.mubr.bf16.mxu0 0
    %182 = vmatmul.mubr.bf16.gmra.mrb[0].mxu0 %v90
    %v183 = vpop.f32.mrb[0].mxu0
    %v184 = vadd.f32 0.0, %v183
    %v185 = vpop.f32.mrb[0].mxu0
    %v186 = vadd.f32 0.0, %v185
    %v187 = vpop.f32.mrb[0].mxu0
    %v188 = vpop.f32.mrb[0].mxu0
    %189 = vdwg.mxu0
    %v190 = vmul.f32 %v143, 0.2
    %v191 = vmul.f32 %v145, 0.2
    %v192 = vmul.f32 %v184, 0.2
    %v193 = vmul.f32 %v186, 0.2
    %v194 = vmax.f32 %v143, %v190
    %v195 = vmax.f32 %v145, %v191
    %v196 = vmax.f32 %v184, %v192
    %v197 = vmax.f32 %v186, %v193
    %v198 = vpack.c.bf16 %v194, %v194
    %v199 = vpack.c.bf16 %v195, %v195
    %v200 = vpack.c.bf16 %v196, %v196
    %v201 = vpack.c.bf16 %v197, %v197
    %v202 = vld [vmem:[#allocation8] sm:$0xff]
    %v203 = vld [vmem:[#allocation8 + $0x8] sm:$0xff]
    %v204 = vld [vmem:[#allocation8 + $0x10] sm:$0xff]
    %v205 = vld [vmem:[#allocation8 + $0x18] sm:$0xff]
    %v206 = vld [vmem:[#allocation8 + $0x20] sm:$0xff]
    %v207 = vld [vmem:[#allocation8 + $0x28] sm:$0xff]
    %v208 = vld [vmem:[#allocation8 + $0x30] sm:$0xff]
    %v209 = vld [vmem:[#allocation8 + $0x38] sm:$0xff]
    %v210 = vld [vmem:[#allocation8 + $0x40] sm:$0xff]
    %v211 = vld [vmem:[#allocation8 + $0x48] sm:$0xff]
    %v212 = vld [vmem:[#allocation8 + $0x50] sm:$0xff]
    %v213 = vld [vmem:[#allocation8 + $0x58] sm:$0xff]
    %v214 = vld [vmem:[#allocation8 + $0x60] sm:$0xff]
    %v215 = vld [vmem:[#allocation8 + $0x68] sm:$0xff]
    %v216 = vld [vmem:[#allocation8 + $0x70] sm:$0xff]
    %v217 = vld [vmem:[#allocation8 + $0x78] sm:$0xff]
    %v218 = vld [vmem:[#allocation8 + $0x80] sm:$0xff]
    %v219 = vld [vmem:[#allocation8 + $0x88] sm:$0xff]
    %v220 = vld [vmem:[#allocation8 + $0x90] sm:$0xff]
    %v221 = vld [vmem:[#allocation8 + $0x98] sm:$0xff]
    %v222 = vld [vmem:[#allocation8 + $0xa0] sm:$0xff]
    %v223 = vld [vmem:[#allocation8 + $0xa8] sm:$0xff]
    %v224 = vld [vmem:[#allocation8 + $0xb0] sm:$0xff]
    %v225 = vld [vmem:[#allocation8 + $0xb8] sm:$0xff]
    %v226 = vld [vmem:[#allocation8 + $0xc0] sm:$0xff]
    %v227 = vld [vmem:[#allocation8 + $0xc8] sm:$0xff]
    %v228 = vld [vmem:[#allocation8 + $0xd0] sm:$0xff]
    %v229 = vld [vmem:[#allocation8 + $0xd8] sm:$0xff]
    %v230 = vld [vmem:[#allocation8 + $0xe0] sm:$0xff]
    %v231 = vld [vmem:[#allocation8 + $0xe8] sm:$0xff]
    %v232 = vld [vmem:[#allocation8 + $0xf0] sm:$0xff]
    %v233 = vld [vmem:[#allocation8 + $0xf8] sm:$0xff]
    %v234 = vld [vmem:[#allocation8 + $0x100] sm:$0xff]
    %v235 = vld [vmem:[#allocation8 + $0x108] sm:$0xff]
    %v236 = vld [vmem:[#allocation8 + $0x110] sm:$0xff]
    %v237 = vld [vmem:[#allocation8 + $0x118] sm:$0xff]
    %v238 = vld [vmem:[#allocation8 + $0x120] sm:$0xff]
    %v239 = vld [vmem:[#allocation8 + $0x128] sm:$0xff]
    %v240 = vld [vmem:[#allocation8 + $0x130] sm:$0xff]
    %v241 = vld [vmem:[#allocation8 + $0x138] sm:$0xff]
    %v242 = vld [vmem:[#allocation8 + $0x140] sm:$0xff]
    %v243 = vld [vmem:[#allocation8 + $0x148] sm:$0xff]
    %v244 = vld [vmem:[#allocation8 + $0x150] sm:$0xff]
    %v245 = vld [vmem:[#allocation8 + $0x158] sm:$0xff]
    %v246 = vld [vmem:[#allocation8 + $0x160] sm:$0xff]
    %v247 = vld [vmem:[#allocation8 + $0x168] sm:$0xff]
    %v248 = vld [vmem:[#allocation8 + $0x170] sm:$0xff]
    %v249 = vld [vmem:[#allocation8 + $0x178] sm:$0xff]
    %v250 = vld [vmem:[#allocation8 + $0x180] sm:$0xff]
    %v251 = vld [vmem:[#allocation8 + $0x188] sm:$0xff]
    %v252 = vld [vmem:[#allocation8 + $0x190] sm:$0xff]
    %v253 = vld [vmem:[#allocation8 + $0x198] sm:$0xff]
    %v254 = vld [vmem:[#allocation8 + $0x1a0] sm:$0xff]
    %v255 = vld [vmem:[#allocation8 + $0x1a8] sm:$0xff]
    %v256 = vld [vmem:[#allocation8 + $0x1b0] sm:$0xff]
    %v257 = vld [vmem:[#allocation8 + $0x1b8] sm:$0xff]
    %v258 = vld [vmem:[#allocation8 + $0x1c0] sm:$0xff]
    %v259 = vld [vmem:[#allocation8 + $0x1c8] sm:$0xff]
    %v260 = vld [vmem:[#allocation8 + $0x1d0] sm:$0xff]
    %v261 = vld [vmem:[#allocation8 + $0x1d8] sm:$0xff]
    %v262 = vld [vmem:[#allocation8 + $0x1e0] sm:$0xff]
    %v263 = vld [vmem:[#allocation8 + $0x1e8] sm:$0xff]
    %v264 = vld [vmem:[#allocation8 + $0x1f0] sm:$0xff]
    %v265 = vld [vmem:[#allocation8 + $0x1f8] sm:$0xff]
    %v266 = vld [vmem:[%s3] sm:$0x3]
    %v268 = vlaneseq
    %v269 = vshrl.u32 %v268, 7
    %v270 = vsub.s32 0, %v269
    %v271 = vrot.slane %v266, %v270
    %v272 = vlaneseq
    %v273 = vshrl.u32 %v272, 7
    %v274 = vsub.s32 1, %v273
    %v275 = vrot.slane %v266, %v274
    %v342 = vunpack.c.l.b16 %v202
    %v343 = vunpack.c.h.b16 %v202
    %v344 = vunpack.c.l.b16 %v203
    %v345 = vunpack.c.h.b16 %v203
    %v346 = vunpack.c.l.b16 %v204
    %v347 = vunpack.c.h.b16 %v204
    %v348 = vunpack.c.l.b16 %v205
    %v349 = vunpack.c.h.b16 %v205
    %v350 = vunpack.c.l.b16 %v206
    %v351 = vunpack.c.h.b16 %v206
    %v352 = vunpack.c.l.b16 %v207
    %v353 = vunpack.c.h.b16 %v207
    %v354 = vunpack.c.l.b16 %v208
    %v355 = vunpack.c.h.b16 %v208
    %v356 = vunpack.c.l.b16 %v209
    %v357 = vunpack.c.h.b16 %v209
    %v358 = vunpack.c.l.b16 %v210
    %v359 = vunpack.c.h.b16 %v210
    %v360 = vunpack.c.l.b16 %v211
    %v361 = vunpack.c.h.b16 %v211
    %v362 = vunpack.c.l.b16 %v212
    %v363 = vunpack.c.h.b16 %v212
    %v364 = vunpack.c.l.b16 %v213
    %v365 = vunpack.c.h.b16 %v213
    %v366 = vunpack.c.l.b16 %v214
    %v367 = vunpack.c.h.b16 %v214
    %v368 = vunpack.c.l.b16 %v215
    %v369 = vunpack.c.h.b16 %v215
    %v370 = vunpack.c.l.b16 %v216
    %v371 = vunpack.c.h.b16 %v216
    %v372 = vunpack.c.l.b16 %v217
    %v373 = vunpack.c.h.b16 %v217
    %v374 = vunpack.c.l.b16 %v218
    %v375 = vunpack.c.h.b16 %v218
    %v376 = vunpack.c.l.b16 %v219
    %v377 = vunpack.c.h.b16 %v219
    %v378 = vunpack.c.l.b16 %v220
    %v379 = vunpack.c.h.b16 %v220
    %v380 = vunpack.c.l.b16 %v221
    %v381 = vunpack.c.h.b16 %v221
    %v382 = vunpack.c.l.b16 %v222
    %v383 = vunpack.c.h.b16 %v222
    %v384 = vunpack.c.l.b16 %v223
    %v385 = vunpack.c.h.b16 %v223
    %v386 = vunpack.c.l.b16 %v224
    %v387 = vunpack.c.h.b16 %v224
    %v388 = vunpack.c.l.b16 %v225
    %v389 = vunpack.c.h.b16 %v225
    %v390 = vunpack.c.l.b16 %v226
    %v391 = vunpack.c.h.b16 %v226
    %v392 = vunpack.c.l.b16 %v227
    %v393 = vunpack.c.h.b16 %v227
    %v394 = vunpack.c.l.b16 %v228
    %v395 = vunpack.c.h.b16 %v228
    %v396 = vunpack.c.l.b16 %v229
    %v397 = vunpack.c.h.b16 %v229
    %v398 = vunpack.c.l.b16 %v230
    %v399 = vunpack.c.h.b16 %v230
    %v400 = vunpack.c.l.b16 %v231
    %v401 = vunpack.c.h.b16 %v231
    %v402 = vunpack.c.l.b16 %v232
    %v403 = vunpack.c.h.b16 %v232
    %v404 = vunpack.c.l.b16 %v233
    %v405 = vunpack.c.h.b16 %v233
    %v406 = vunpack.c.l.b16 %v234
    %v407 = vunpack.c.h.b16 %v234
    %v408 = vunpack.c.l.b16 %v235
    %v409 = vunpack.c.h.b16 %v235
    %v410 = vunpack.c.l.b16 %v236
    %v411 = vunpack.c.h.b16 %v236
    %v412 = vunpack.c.l.b16 %v237
    %v413 = vunpack.c.h.b16 %v237
    %v414 = vunpack.c.l.b16 %v238
    %v415 = vunpack.c.h.b16 %v238
    %v416 = vunpack.c.l.b16 %v239
    %v417 = vunpack.c.h.b16 %v239
    %v418 = vunpack.c.l.b16 %v240
    %v419 = vunpack.c.h.b16 %v240
    %v420 = vunpack.c.l.b16 %v241
    %v421 = vunpack.c.h.b16 %v241
    %v422 = vunpack.c.l.b16 %v242
    %v423 = vunpack.c.h.b16 %v242
    %v424 = vunpack.c.l.b16 %v243
    %v425 = vunpack.c.h.b16 %v243
    %v426 = vunpack.c.l.b16 %v244
    %v427 = vunpack.c.h.b16 %v244
    %v428 = vunpack.c.l.b16 %v245
    %v429 = vunpack.c.h.b16 %v245
    %v430 = vunpack.c.l.b16 %v246
    %v431 = vunpack.c.h.b16 %v246
    %v432 = vunpack.c.l.b16 %v247
    %v433 = vunpack.c.h.b16 %v247
    %v434 = vunpack.c.l.b16 %v248
    %v435 = vunpack.c.h.b16 %v248
    %v436 = vunpack.c.l.b16 %v249
    %v437 = vunpack.c.h.b16 %v249
    %v438 = vunpack.c.l.b16 %v250
    %v439 = vunpack.c.h.b16 %v250
    %v440 = vunpack.c.l.b16 %v251
    %v441 = vunpack.c.h.b16 %v251
    %v442 = vunpack.c.l.b16 %v252
    %v443 = vunpack.c.h.b16 %v252
    %v444 = vunpack.c.l.b16 %v253
    %v445 = vunpack.c.h.b16 %v253
    %v446 = vunpack.c.l.b16 %v254
    %v447 = vunpack.c.h.b16 %v254
    %v448 = vunpack.c.l.b16 %v255
    %v449 = vunpack.c.h.b16 %v255
    %v450 = vunpack.c.l.b16 %v256
    %v451 = vunpack.c.h.b16 %v256
    %v452 = vunpack.c.l.b16 %v257
    %v453 = vunpack.c.h.b16 %v257
    %v454 = vunpack.c.l.b16 %v258
    %v455 = vunpack.c.h.b16 %v258
    %v456 = vunpack.c.l.b16 %v259
    %v457 = vunpack.c.h.b16 %v259
    %v458 = vunpack.c.l.b16 %v260
    %v459 = vunpack.c.h.b16 %v260
    %v460 = vunpack.c.l.b16 %v261
    %v461 = vunpack.c.h.b16 %v261
    %v462 = vunpack.c.l.b16 %v262
    %v463 = vunpack.c.h.b16 %v262
    %v464 = vunpack.c.l.b16 %v263
    %v465 = vunpack.c.h.b16 %v263
    %v466 = vunpack.c.l.b16 %v264
    %v467 = vunpack.c.h.b16 %v264
    %v468 = vunpack.c.l.b16 %v265
    %v469 = vunpack.c.h.b16 %v265
    %v470 = vpack.c.b16 %v344, %v342
    %v471 = vpack.c.b16 %v345, %v343
    %v472 = vpack.c.b16 %v348, %v346
    %v473 = vpack.c.b16 %v349, %v347
    %v474 = vpack.c.b16 %v352, %v350
    %v475 = vpack.c.b16 %v353, %v351
    %v476 = vpack.c.b16 %v356, %v354
    %v477 = vpack.c.b16 %v357, %v355
    %v478 = vpack.c.b16 %v360, %v358
    %v479 = vpack.c.b16 %v361, %v359
    %v480 = vpack.c.b16 %v364, %v362
    %v481 = vpack.c.b16 %v365, %v363
    %v482 = vpack.c.b16 %v368, %v366
    %v483 = vpack.c.b16 %v369, %v367
    %v484 = vpack.c.b16 %v372, %v370
    %v485 = vpack.c.b16 %v373, %v371
    %v486 = vpack.c.b16 %v376, %v374
    %v487 = vpack.c.b16 %v377, %v375
    %v488 = vpack.c.b16 %v380, %v378
    %v489 = vpack.c.b16 %v381, %v379
    %v490 = vpack.c.b16 %v384, %v382
    %v491 = vpack.c.b16 %v385, %v383
    %v492 = vpack.c.b16 %v388, %v386
    %v493 = vpack.c.b16 %v389, %v387
    %v494 = vpack.c.b16 %v392, %v390
    %v495 = vpack.c.b16 %v393, %v391
    %v496 = vpack.c.b16 %v396, %v394
    %v497 = vpack.c.b16 %v397, %v395
    %v498 = vpack.c.b16 %v400, %v398
    %v499 = vpack.c.b16 %v401, %v399
    %v500 = vpack.c.b16 %v404, %v402
    %v501 = vpack.c.b16 %v405, %v403
    %v502 = vpack.c.b16 %v408, %v406
    %v503 = vpack.c.b16 %v409, %v407
    %v504 = vpack.c.b16 %v412, %v410
    %v505 = vpack.c.b16 %v413, %v411
    %v506 = vpack.c.b16 %v416, %v414
    %v507 = vpack.c.b16 %v417, %v415
    %v508 = vpack.c.b16 %v420, %v418
    %v509 = vpack.c.b16 %v421, %v419
    %v510 = vpack.c.b16 %v424, %v422
    %v511 = vpack.c.b16 %v425, %v423
    %v512 = vpack.c.b16 %v428, %v426
    %v513 = vpack.c.b16 %v429, %v427
    %v514 = vpack.c.b16 %v432, %v430
    %v515 = vpack.c.b16 %v433, %v431
    %v516 = vpack.c.b16 %v436, %v434
    %v517 = vpack.c.b16 %v437, %v435
    %v518 = vpack.c.b16 %v440, %v438
    %v519 = vpack.c.b16 %v441, %v439
    %v520 = vpack.c.b16 %v444, %v442
    %v521 = vpack.c.b16 %v445, %v443
    %v522 = vpack.c.b16 %v448, %v446
    %v523 = vpack.c.b16 %v449, %v447
    %v524 = vpack.c.b16 %v452, %v450
    %v525 = vpack.c.b16 %v453, %v451
    %v526 = vpack.c.b16 %v456, %v454
    %v527 = vpack.c.b16 %v457, %v455
    %v528 = vpack.c.b16 %v460, %v458
    %v529 = vpack.c.b16 %v461, %v459
    %v530 = vpack.c.b16 %v464, %v462
    %v531 = vpack.c.b16 %v465, %v463
    %v532 = vpack.c.b16 %v468, %v466
    %v533 = vpack.c.b16 %v469, %v467
    %598 = vmatprep.subr.bf16.mxu0 %v471
    %599 = vmatpush1.bf16.msra.mxu0 %v470
    %600 = vmatprep.subr.bf16.mxu0 %v473
    %601 = vmatpush1.bf16.msra.mxu0 %v472
    %602 = vmatprep.subr.bf16.mxu0 %v475
    %603 = vmatpush1.bf16.msra.mxu0 %v474
    %604 = vmatprep.subr.bf16.mxu0 %v477
    %605 = vmatpush1.bf16.msra.mxu0 %v476
    %606 = vmatprep.subr.bf16.mxu0 %v479
    %607 = vmatpush1.bf16.msra.mxu0 %v478
    %608 = vmatprep.subr.bf16.mxu0 %v481
    %609 = vmatpush1.bf16.msra.mxu0 %v480
    %610 = vmatprep.subr.bf16.mxu0 %v483
    %611 = vmatpush1.bf16.msra.mxu0 %v482
    %612 = vmatprep.subr.bf16.mxu0 %v485
    %613 = vmatpush1.bf16.msra.mxu0 %v484
    %614 = vmatprep.subr.bf16.mxu0 %v487
    %615 = vmatpush1.bf16.msra.mxu0 %v486
    %616 = vmatprep.subr.bf16.mxu0 %v489
    %617 = vmatpush1.bf16.msra.mxu0 %v488
    %618 = vmatprep.subr.bf16.mxu0 %v491
    %619 = vmatpush1.bf16.msra.mxu0 %v490
    %620 = vmatprep.subr.bf16.mxu0 %v493
    %621 = vmatpush1.bf16.msra.mxu0 %v492
    %622 = vmatprep.subr.bf16.mxu0 %v495
    %623 = vmatpush1.bf16.msra.mxu0 %v494
    %624 = vmatprep.subr.bf16.mxu0 %v497
    %625 = vmatpush1.bf16.msra.mxu0 %v496
    %626 = vmatprep.subr.bf16.mxu0 %v499
    %627 = vmatpush1.bf16.msra.mxu0 %v498
    %628 = vmatprep.subr.bf16.mxu0 %v501
    %629 = vmatpush1.bf16.msra.mxu0 %v500
    %630 = vmatprep.mubr.bf16.mxu0 %v199
    %631 = vmatmul.mubr.bf16.gmra.mrb[0].mxu0 %v198
    %v632 = vpop.f32.mrb[0].mxu0
    %v633 = vadd.f32 %v271, %v632
    %v634 = vpop.f32.mrb[0].mxu0
    %v635 = vadd.f32 %v275, %v634
    %v636 = vpop.f32.mrb[0].mxu0
    %v637 = vpop.f32.mrb[0].mxu0
    %638 = vdwg.mxu0
    %639 = vmatprep.subr.bf16.mxu0 %v503
    %640 = vmatpush1.bf16.msra.mxu0 %v502
    %641 = vmatprep.subr.bf16.mxu0 %v505
    %642 = vmatpush1.bf16.msra.mxu0 %v504
    %643 = vmatprep.subr.bf16.mxu0 %v507
    %644 = vmatpush1.bf16.msra.mxu0 %v506
    %645 = vmatprep.subr.bf16.mxu0 %v509
    %646 = vmatpush1.bf16.msra.mxu0 %v508
    %647 = vmatprep.subr.bf16.mxu0 %v511
    %648 = vmatpush1.bf16.msra.mxu0 %v510
    %649 = vmatprep.subr.bf16.mxu0 %v513
    %650 = vmatpush1.bf16.msra.mxu0 %v512
    %651 = vmatprep.subr.bf16.mxu0 %v515
    %652 = vmatpush1.bf16.msra.mxu0 %v514
    %653 = vmatprep.subr.bf16.mxu0 %v517
    %654 = vmatpush1.bf16.msra.mxu0 %v516
    %655 = vmatprep.subr.bf16.mxu0 %v519
    %656 = vmatpush1.bf16.msra.mxu0 %v518
    %657 = vmatprep.subr.bf16.mxu0 %v521
    %658 = vmatpush1.bf16.msra.mxu0 %v520
    %659 = vmatprep.subr.bf16.mxu0 %v523
    %660 = vmatpush1.bf16.msra.mxu0 %v522
    %661 = vmatprep.subr.bf16.mxu0 %v525
    %662 = vmatpush1.bf16.msra.mxu0 %v524
    %663 = vmatprep.subr.bf16.mxu0 %v527
    %664 = vmatpush1.bf16.msra.mxu0 %v526
    %665 = vmatprep.subr.bf16.mxu0 %v529
    %666 = vmatpush1.bf16.msra.mxu0 %v528
    %667 = vmatprep.subr.bf16.mxu0 %v531
    %668 = vmatpush1.bf16.msra.mxu0 %v530
    %669 = vmatprep.subr.bf16.mxu0 %v533
    %670 = vmatpush1.bf16.msra.mxu0 %v532
    %671 = vmatprep.mubr.bf16.mxu0 %v201
    %672 = vmatmul.mubr.bf16.gmra.mrb[0].mxu0 %v200
    %v673 = vpop.f32.mrb[0].mxu0
    %v674 = vadd.f32 %v633, %v673
    %v675 = vpop.f32.mrb[0].mxu0
    %v676 = vadd.f32 %v635, %v675
    %v677 = vpop.f32.mrb[0].mxu0
    %v678 = vpop.f32.mrb[0].mxu0
    %679 = vdwg.mxu0
    %v680 = vmul.f32 %v674, 0.2
    %v681 = vmul.f32 %v676, 0.2
    %v682 = vmax.f32 %v674, %v680
    %v683 = vmax.f32 %v676, %v681
    %v684 = vld [vmem:[%s4] sm:$0x3]
    %v686 = vlaneseq
    %v687 = vshrl.u32 %v686, 7
    %v688 = vsub.s32 0, %v687
    %v689 = vrot.slane %v684, %v688
    %v690 = vlaneseq
    %v691 = vshrl.u32 %v690, 7
    %v692 = vsub.s32 1, %v691
    %v693 = vrot.slane %v684, %v692
    %v696 = vmul.f32 %v682, %v689
    %v697 = vmul.f32 %v683, %v693
    %v698 = vadd.f32 %v696, %v697
    %699 = vadd.xlane.f32.xlu0 %v698
    %v700 = vpop.xlane.xlu0 %699
    %v701 = vld [vmem:[#allocation2] sm:$0x1]
    %703 = vset.pattern.permute.xlu0 0
    %704 = vperm.xlu0 %703, %v701
    %v705 = vpop.permute.xlu0 %704
    %v707 = vlaneseq
    %v708 = vshrl.u32 %v707, 7
    %v709 = vsub.s32 0, %v708
    %v710 = vrot.slane %v705, %v709
    %v711 = vadd.f32 %v700, %v710
    %v712 = vxor.u32 %v711, 2147483648
    %v713 = vmul.f32 %v712, 1.442695
    %v714 = vpow.pop %v713
    %v715 = vadd.f32 %v714, 1.0
    %v716 = vrcp.pop %v715
    %v717 = vmul.f32 1.0, %v716
    %v719 = vlaneseq
    %v720 = vand.u32 %v719, 127
    %v721 = vlaneseq
    %v722 = vshrl.u32 %v721, 7
    %v723 = vsub.s32 %v720, %v722
    %v724 = vrot.slane %v717, %v723
    %vm726 = vcmask 57344
    %727 = vst.msk [vmem:[#allocation9] sm:$0x1] %vm726, %v724
    // Predicated region
    $region38: #{tpu_custom_call.1} parent=1 // pred_check
      _
    $region39: #{tpu_custom_call.1} parent=1 // pred_check_branch
      %729 = sbr.rel (0) target = $region41
    $region40: #{tpu_custom_call.1} parent=1 // pred_region
      %s731 = ssub.s32 16, 16
      %732 = vsyncadd [#allocation5], %s731
      %s734 = sshll.u32 [#allocation9], 4
      %s735 = int_to_ptr.vmem [resolvable:$true] %s734
      %737 = dma.vmem_to_hbm [thread:$0]  %s735, 16, %s6, [#allocation5]
    $region41: #{tpu_custom_call.1} parent=1 // pred_fallthru
      _
    // Predicated region
    $region42: #{tpu_custom_call.1} parent=1 // pred_check
      _
    $region43: #{tpu_custom_call.1} parent=1 // pred_check_branch
      %739 = sbr.rel (0) target = $region45
    $region44: #{tpu_custom_call.1} parent=1 // pred_region
      %740 = dma.done [#allocation5], 16
    $region45: #{tpu_custom_call.1} parent=1 // pred_fallthru
      _
    %741 = vsyncpa [#allocation4], 1
    %742 = vsyncpa [#allocation7], 1
    %743 = vsyncpa [#allocation5], 1

</llo_original>
